<compile_context>
chip_gen: v7x
topology: tpu7x:2x2x1
jax: 0.10.0
libtpu: 0.0.40
codegen_flags: <defaults>
</compile_context>

<pallas_src>
import math
import functools

import jax
import jax.numpy as jnp
from jax import lax
from jax.experimental import pallas as pl
from jax.experimental.pallas import tpu as pltpu


# ----------------------------------------------------------------------------
# Phase 1: K/V compression.  grid = (B, N // TNK); second axis is a reduction.
# ----------------------------------------------------------------------------
def _compress_kernel(x_ref, ew_ref, fw_ref, wk_ref, wv_ref, eb_ref, fb_ref,
                     kpt_ref, vf_ref, xe_acc, xf_acc):
    j = pl.program_id(1)

    @pl.when(j == 0)
    def _init():
        xe_acc[...] = jnp.zeros_like(xe_acc)
        xf_acc[...] = jnp.zeros_like(xf_acc)

    x = x_ref[0]                                                     # (TNK, C) bf16
    # Accumulate E_w @ x and F_w @ x over sequence chunks (f32 accumulation).
    xe_acc[...] += jnp.dot(ew_ref[...], x, preferred_element_type=jnp.float32)
    xf_acc[...] += jnp.dot(fw_ref[...], x, preferred_element_type=jnp.float32)

    @pl.when(j == pl.num_programs(1) - 1)
    def _finish():
        xe = xe_acc[...].astype(jnp.bfloat16)                        # (k, C)
        xf = xf_acc[...].astype(jnp.bfloat16)
        # Apply the fused per-head K/V projections once per batch element.
        kpt = jnp.dot(xe, wk_ref[...], preferred_element_type=jnp.float32) + eb_ref[...]
        vf = jnp.dot(xf, wv_ref[...], preferred_element_type=jnp.float32) + fb_ref[...]
        kpt_ref[0] = kpt.astype(kpt_ref.dtype)                       # (k, C) bf16
        vf_ref[0] = vf.astype(vf_ref.dtype)


# ----------------------------------------------------------------------------
# Phase 2: attention + output projection.  grid = (B, N // TNQ); all independent.
# ----------------------------------------------------------------------------
def _attend_kernel(x_ref, wq_ref, kpt_ref, vf_ref, wo_ref, bo_ref, o_ref,
                   *, nheads, head_dim):
    inv_sqrt_d = 1.0 / math.sqrt(head_dim)

    x = x_ref[0]                                                     # (TNQ, C) bf16
    # One wide, lane-dense Q projection for all heads.
    q = jnp.dot(x, wq_ref[...], preferred_element_type=jnp.float32)  # (TNQ, C) f32
    kpt = kpt_ref[0]                                                 # (k, C) bf16
    vf = vf_ref[0]                                                   # (k, C) bf16

    tq = q.shape[0]
    cout = wo_ref.shape[1]
    acc = jnp.zeros((tq, cout), jnp.float32)                         # output-proj accumulator

    for h in range(nheads):                                          # small, static -> unrolled
        lo = h * head_dim
        hi = lo + head_dim
        q_h = q[:, lo:hi].astype(jnp.bfloat16)                       # (TNQ, D)
        # scores = Q_h @ KpT_h^T  (contract over D)
        s = lax.dot_general(q_h, kpt[:, lo:hi], (((1,), (1,)), ((), ())),
                            preferred_element_type=jnp.float32) * inv_sqrt_d   # (TNQ, k)
        # softmax over the compressed dim (f32 elementwise path on all generations)
        s = s - jnp.max(s, axis=-1, keepdims=True)
        e = jnp.exp(s)
        p = e * pl.reciprocal(jnp.sum(e, axis=-1, keepdims=True), approx=True)
        # TODO(synk): dropout on p omitted (inference semantics).
        ctx = jnp.dot(p.astype(jnp.bfloat16), vf[:, lo:hi],
                      preferred_element_type=jnp.float32)            # (TNQ, D)
        # Accumulate the output projection per head -> no concat, bounded live ranges.
        acc = acc + jnp.dot(ctx.astype(jnp.bfloat16), wo_ref[lo:hi, :],
                            preferred_element_type=jnp.float32)      # (TNQ, C)

    o_ref[0] = (acc + bo_ref[...]).astype(o_ref.dtype)


# ----------------------------------------------------------------------------
# Wrapper
# ----------------------------------------------------------------------------
def _pick_tile(n, multiple, target):
    """Largest divisor of n that is a multiple of `multiple` and <= target.
    Falls back to the full axis when no such divisor exists (always correct)."""
    if n <= target:
        return n
    t = target - (target % multiple)
    while t >= multiple:
        if n % t == 0:
            return t
        t -= multiple
    return n


def _vmem_limit(resident_bytes):
    # Sized to the actual double-buffered blocks + headroom; capped below the
    # smallest physical VMEM across generations (v7x: 64 MiB).
    return int(min(max(resident_bytes + (4 << 20), 16 << 20), 48 << 20))


def linformer_multihead(x, params, *, head_dim, q_tile=512, kv_tile=512):
    """x: (B, N, C) float32.  params: dict (see make_params)."""
    B, N, C = x.shape
    H = params["wq"].shape[0]
    k = params["ew"].shape[0]
    D = head_dim
    assert H * D == C, "channels must equal nheads * head_dim"

    # Fuse per-head projection weights into wide (C, C) matrices; bf16 matmul
    # operands (f32 accumulation happens inside the kernels).
    to_wide = lambda w: jnp.transpose(w, (1, 0, 2)).reshape(C, H * D)
    wq = to_wide(params["wq"]).astype(jnp.bfloat16)
    wk = to_wide(params["wk"]).astype(jnp.bfloat16)
    wv = to_wide(params["wv"]).astype(jnp.bfloat16)
    ew = params["ew"].astype(jnp.bfloat16)
    fw = params["fw"].astype(jnp.bfloat16)
    wo = params["wo"].astype(jnp.bfloat16)
    eb, fb, bo = params["eb"], params["fb"], params["bo"]            # f32 biases
    xb = x.astype(jnp.bfloat16)

    # Row tiles: ew/fw blocks need a lane dim that is a multiple of 128 (or full N).
    tnk = _pick_tile(N, 128, kv_tile)
    tnq = _pick_tile(N, 8, q_tile)
    nk = N // tnk
    nq = N // tnq

    # -------------------- Phase 1: compression --------------------
    comp_vmem = _vmem_limit(
        2 * ((tnk * C + 2 * k * tnk + 2 * C * C + 2 * k * C) * 2 + 2 * k * 4)
        + 2 * k * C * 4)
    # NOTE: grid-invariant weight blocks could be single-buffered
    # (pipeline_mode=pl.Buffered(1)) for extra VMEM headroom at large C.
    kpt, vf = pl.pallas_call(
        _compress_kernel,
        out_shape=(jax.ShapeDtypeStruct((B, k, C), jnp.bfloat16),
                   jax.ShapeDtypeStruct((B, k, C), jnp.bfloat16)),
        grid_spec=pltpu.PrefetchScalarGridSpec(
            num_scalar_prefetch=0,
            grid=(B, nk),
            in_specs=[
                pl.BlockSpec((1, tnk, C), lambda b, j: (b, j, 0)),   # x chunk
                pl.BlockSpec((k, tnk), lambda b, j: (0, j)),         # E weight chunk
                pl.BlockSpec((k, tnk), lambda b, j: (0, j)),         # F weight chunk
                pl.BlockSpec((C, C), lambda b, j: (0, 0)),           # Wk (fused heads)
                pl.BlockSpec((C, C), lambda b, j: (0, 0)),           # Wv (fused heads)
                pl.BlockSpec((k, 1), lambda b, j: (0, 0)),           # E bias
                pl.BlockSpec((k, 1), lambda b, j: (0, 0)),           # F bias
            ],
            out_specs=(
                pl.BlockSpec((1, k, C), lambda b, j: (b, 0, 0)),     # KpT
                pl.BlockSpec((1, k, C), lambda b, j: (b, 0, 0)),     # Vf
            ),
            scratch_shapes=[pltpu.VMEM((k, C), jnp.float32),
                            pltpu.VMEM((k, C), jnp.float32)],
        ),
        compiler_params=pltpu.CompilerParams(
            dimension_semantics=("parallel", "arbitrary"),
            vmem_limit_bytes=comp_vmem),
    )(xb, ew, fw, wk, wv, eb, fb)

    # -------------------- Phase 2: attention + output projection --------------------
    att_vmem = _vmem_limit(
        2 * ((tnq * C + 2 * C * C + 2 * k * C) * 2 + C * 4 + tnq * C * 4))
    out = pl.pallas_call(
        functools.partial(_attend_kernel, nheads=H, head_dim=D),
        out_shape=jax.ShapeDtypeStruct((B, N, C), jnp.float32),
        grid_spec=pltpu.PrefetchScalarGridSpec(
            num_scalar_prefetch=0,
            grid=(B, nq),
            in_specs=[
                pl.BlockSpec((1, tnq, C), lambda b, i: (b, i, 0)),   # x row tile
                pl.BlockSpec((C, C), lambda b, i: (0, 0)),           # Wq (fused heads)
                pl.BlockSpec((1, k, C), lambda b, i: (b, 0, 0)),     # KpT
                pl.BlockSpec((1, k, C), lambda b, i: (b, 0, 0)),     # Vf
                pl.BlockSpec((C, C), lambda b, i: (0, 0)),           # Wo (pre-transposed)
                pl.BlockSpec((1, C), lambda b, i: (0, 0)),           # Wo bias
            ],
            out_specs=pl.BlockSpec((1, tnq, C), lambda b, i: (b, i, 0)),
        ),
        compiler_params=pltpu.CompilerParams(
            dimension_semantics=("parallel", "parallel"),
            vmem_limit_bytes=att_vmem),
    )(xb, wq, kpt, vf, wo, bo)
    return out


# ----------------------------------------------------------------------------
# Pure-JAX reference mirroring the PyTorch forward (eval mode)
# ----------------------------------------------------------------------------
def linformer_reference(x, params, *, head_dim):
    H = params["wq"].shape[0]
    outs = []
    for h in range(H):
        Q = x @ params["wq"][h]                                            # (B, N, D)
        K = x @ params["wk"][h]
        V = x @ params["wv"][h]
        Kc = jnp.einsum("bnd,kn->bdk", K, params["ew"]) + params["eb"][:, 0]   # (B, D, k)
        P = (Q @ Kc) / jnp.sqrt(jnp.asarray(head_dim, x.dtype))                # (B, N, k)
        P = jax.nn.softmax(P, axis=-1)
        Vc = jnp.einsum("bnd,kn->bkd", V, params["fw"]) + params["fb"][None, :, :]  # (B, k, D)
        outs.append(P @ Vc)                                                # (B, N, D)
    cat = jnp.concatenate(outs, axis=-1)                                   # (B, N, C)
    return cat @ params["wo"] + params["bo"][0]


def make_params(key, channels, nheads, seq_len, compressed_dim):
    head_dim = channels // nheads
    keys = jax.random.split(key, 10)
    s = 0.1
    params = {
        # stored pre-transposed: (H, in=C, out=D)
        "wq": s * jax.random.normal(keys[0], (nheads, channels, head_dim), jnp.float32),
        "wk": s * jax.random.normal(keys[1], (nheads, channels, head_dim), jnp.float32),
        "wv": s * jax.random.normal(keys[2], (nheads, channels, head_dim), jnp.float32),
        # Linformer E/F: Linear(seq_len -> compressed_dim), PyTorch weight (k, N)
        "ew": s * jax.random.normal(keys[3], (compressed_dim, seq_len), jnp.float32),
        "eb": s * jax.random.normal(keys[4], (compressed_dim, 1), jnp.float32),
        "fw": s * jax.random.normal(keys[5], (compressed_dim, seq_len), jnp.float32),
        "fb": s * jax.random.normal(keys[6], (compressed_dim, 1), jnp.float32),
        # output projection, pre-transposed: (in=C, out=C)
        "wo": s * jax.random.normal(keys[7], (channels, channels), jnp.float32),
        "bo": s * jax.random.normal(keys[8], (1, channels), jnp.float32),
    }
    return params, head_dim


if __name__ == "__main__":
    B, N, C = 2, 16, 32          # batch, seq_len, channels
    nheads, comp_dim = 4, 8      # heads, compressed_dim

    key = jax.random.PRNGKey(0)
    kx, kp = jax.random.split(key)
    x = jax.random.normal(kx, (B, N, C), jnp.float32)
    params, head_dim = make_params(kp, C, nheads, N, comp_dim)

    out = linformer_multihead(x, params, head_dim=head_dim)
    out = jax.block_until_ready(out)

    # Reference uses the same bf16-rounded operands (kernel runs bf16 matmuls with
    # f32 accumulation); tolerance loosened accordingly.
    rt = lambda a: a.astype(jnp.bfloat16).astype(jnp.float32)
    ref_params = {name: (rt(val) if name in ("wq", "wk", "wv", "ew", "fw", "wo") else val)
                  for name, val in params.items()}
    ref = linformer_reference(rt(x), ref_params, head_dim=head_dim)

    assert out.shape == (B, N, C)
    max_err = float(jnp.max(jnp.abs(out - ref)))
    assert jnp.allclose(out, ref, atol=2e-2, rtol=2e-2), f"mismatch vs reference: {max_err}"

    print("KERNEL_OK")
</pallas_src>

<mosaic_0001>
module attributes {stable_mosaic.version = 11 : i64} {
  func.func @_compress_kernel(%arg0: i32, %arg1: i32, %arg2: memref<1x16x32xbf16, #tpu.memory_space<vmem>>, %arg3: memref<8x16xbf16, #tpu.memory_space<vmem>>, %arg4: memref<8x16xbf16, #tpu.memory_space<vmem>>, %arg5: memref<32x32xbf16, #tpu.memory_space<vmem>>, %arg6: memref<32x32xbf16, #tpu.memory_space<vmem>>, %arg7: memref<8x1xf32, #tpu.memory_space<vmem>>, %arg8: memref<8x1xf32, #tpu.memory_space<vmem>>, %arg9: memref<1x8x32xbf16, #tpu.memory_space<vmem>>, %arg10: memref<1x8x32xbf16, #tpu.memory_space<vmem>>, %arg11: memref<8x32xf32, #tpu.memory_space<vmem>>, %arg12: memref<8x32xf32, #tpu.memory_space<vmem>>) attributes {dimension_semantics = [#tpu.dimension_semantics<parallel>, #tpu.dimension_semantics<arbitrary>], iteration_bounds = array<i64: 2, 1>, scalar_prefetch = 0 : i64, scratch_operands = 2 : i64, tpu.core_type = #tpu.core_type<tc>, window_params = [{transform_indices = @transform_0, window_bounds = array<i64: 1, 16, 32>}, {transform_indices = @transform_1, window_bounds = array<i64: 8, 16>}, {transform_indices = @transform_2, window_bounds = array<i64: 8, 16>}, {pipeline_mode = #tpu.pipeline_mode<synchronous>, transform_indices = @transform_3, window_bounds = array<i64: 32, 32>}, {pipeline_mode = #tpu.pipeline_mode<synchronous>, transform_indices = @transform_4, window_bounds = array<i64: 32, 32>}, {pipeline_mode = #tpu.pipeline_mode<synchronous>, transform_indices = @transform_5, window_bounds = array<i64: 8, 1>}, {pipeline_mode = #tpu.pipeline_mode<synchronous>, transform_indices = @transform_6, window_bounds = array<i64: 8, 1>}, {transform_indices = @transform_7, window_bounds = array<i64: 1, 8, 32>}, {transform_indices = @transform_8, window_bounds = array<i64: 1, 8, 32>}]} {
    %c0_i32 = arith.constant 0 : i32
    %0 = arith.cmpi eq, %arg1, %c0_i32 : i32
    %1 = arith.extui %0 : i1 to i32
    %c0_i32_0 = arith.constant 0 : i32
    %2 = arith.cmpi ne, %1, %c0_i32_0 : i32
    scf.if %2 {
      %cst_18 = arith.constant 0.000000e+00 : f32
      %18 = vector.broadcast %cst_18 : f32 to vector<8x32xf32>
      %c0_19 = arith.constant 0 : index
      %c0_20 = arith.constant 0 : index
      %19 = vector.load %arg11[%c0_19, %c0_20] : memref<8x32xf32, #tpu.memory_space<vmem>>, vector<8x32xf32>
      tpu.vector_store %arg11[%c0_19, %c0_20], %18 {strides = array<i32>} : memref<8x32xf32, #tpu.memory_space<vmem>>, vector<8x32xf32>,
      %cst_21 = arith.constant 0.000000e+00 : f32
      %20 = vector.broadcast %cst_21 : f32 to vector<8x32xf32>
      %c0_22 = arith.constant 0 : index
      %c0_23 = arith.constant 0 : index
      %21 = vector.load %arg12[%c0_22, %c0_23] : memref<8x32xf32, #tpu.memory_space<vmem>>, vector<8x32xf32>
      tpu.vector_store %arg12[%c0_22, %c0_23], %20 {strides = array<i32>} : memref<8x32xf32, #tpu.memory_space<vmem>>, vector<8x32xf32>,
    } else {
    }
    %c0 = arith.constant 0 : index
    %c0_1 = arith.constant 0 : index
    %c0_2 = arith.constant 0 : index
    %3 = vector.load %arg2[%c0, %c0_1, %c0_2] : memref<1x16x32xbf16, #tpu.memory_space<vmem>>, vector<1x16x32xbf16>
    %4 = vector.shape_cast %3 : vector<1x16x32xbf16> to vector<16x32xbf16>
    %c0_3 = arith.constant 0 : index
    %c0_4 = arith.constant 0 : index
    %5 = vector.load %arg11[%c0_3, %c0_4] : memref<8x32xf32, #tpu.memory_space<vmem>>, vector<8x32xf32>
    %c0_5 = arith.constant 0 : index
    %c0_6 = arith.constant 0 : index
    %6 = vector.load %arg3[%c0_5, %c0_6] : memref<8x16xbf16, #tpu.memory_space<vmem>>, vector<8x16xbf16>
    %cst = arith.constant dense<0.000000e+00> : vector<8x32xf32>
    %7 = tpu.matmul %6, %4, %cst {dimension_numbers = #tpu.dot_dimension_numbers<[1], [0], [0], [1], [0, 0, 1, 1], [], []>} : vector<8x16xbf16>, vector<16x32xbf16>, vector<8x32xf32> -> vector<8x32xf32>
    %8 = arith.addf %5, %7 : vector<8x32xf32>
    %c0_7 = arith.constant 0 : index
    %c0_8 = arith.constant 0 : index
    %9 = vector.load %arg11[%c0_7, %c0_8] : memref<8x32xf32, #tpu.memory_space<vmem>>, vector<8x32xf32>
    tpu.vector_store %arg11[%c0_7, %c0_8], %8 {strides = array<i32>} : memref<8x32xf32, #tpu.memory_space<vmem>>, vector<8x32xf32>,
    %c0_9 = arith.constant 0 : index
    %c0_10 = arith.constant 0 : index
    %10 = vector.load %arg12[%c0_9, %c0_10] : memref<8x32xf32, #tpu.memory_space<vmem>>, vector<8x32xf32>
    %c0_11 = arith.constant 0 : index
    %c0_12 = arith.constant 0 : index
    %11 = vector.load %arg4[%c0_11, %c0_12] : memref<8x16xbf16, #tpu.memory_space<vmem>>, vector<8x16xbf16>
    %cst_13 = arith.constant dense<0.000000e+00> : vector<8x32xf32>
    %12 = tpu.matmul %11, %4, %cst_13 {dimension_numbers = #tpu.dot_dimension_numbers<[1], [0], [0], [1], [0, 0, 1, 1], [], []>} : vector<8x16xbf16>, vector<16x32xbf16>, vector<8x32xf32> -> vector<8x32xf32>
    %13 = arith.addf %10, %12 : vector<8x32xf32>
    %c0_14 = arith.constant 0 : index
    %c0_15 = arith.constant 0 : index
    %14 = vector.load %arg12[%c0_14, %c0_15] : memref<8x32xf32, #tpu.memory_space<vmem>>, vector<8x32xf32>
    tpu.vector_store %arg12[%c0_14, %c0_15], %13 {strides = array<i32>} : memref<8x32xf32, #tpu.memory_space<vmem>>, vector<8x32xf32>,
    %c0_i32_16 = arith.constant 0 : i32
    %15 = arith.cmpi eq, %arg1, %c0_i32_16 : i32
    %16 = arith.extui %15 : i1 to i32
    %c0_i32_17 = arith.constant 0 : i32
    %17 = arith.cmpi ne, %16, %c0_i32_17 : i32
    scf.if %17 {
      %c0_18 = arith.constant 0 : index
      %c0_19 = arith.constant 0 : index
      %18 = vector.load %arg11[%c0_18, %c0_19] : memref<8x32xf32, #tpu.memory_space<vmem>>, vector<8x32xf32>
      %19 = arith.truncf %18 : vector<8x32xf32> to vector<8x32xbf16>
      %c0_20 = arith.constant 0 : index
      %c0_21 = arith.constant 0 : index
      %20 = vector.load %arg12[%c0_20, %c0_21] : memref<8x32xf32, #tpu.memory_space<vmem>>, vector<8x32xf32>
      %21 = arith.truncf %20 : vector<8x32xf32> to vector<8x32xbf16>
      %c0_22 = arith.constant 0 : index
      %c0_23 = arith.constant 0 : index
      %22 = vector.load %arg5[%c0_22, %c0_23] : memref<32x32xbf16, #tpu.memory_space<vmem>>, vector<32x32xbf16>
      %cst_24 = arith.constant dense<0.000000e+00> : vector<8x32xf32>
      %23 = tpu.matmul %19, %22, %cst_24 {dimension_numbers = #tpu.dot_dimension_numbers<[1], [0], [0], [1], [0, 0, 1, 1], [], []>} : vector<8x32xbf16>, vector<32x32xbf16>, vector<8x32xf32> -> vector<8x32xf32>
      %c0_25 = arith.constant 0 : index
      %c0_26 = arith.constant 0 : index
      %24 = vector.load %arg7[%c0_25, %c0_26] : memref<8x1xf32, #tpu.memory_space<vmem>>, vector<8x1xf32>
      %25 = vector.broadcast %24 : vector<8x1xf32> to vector<8x32xf32>
      %26 = arith.addf %23, %25 : vector<8x32xf32>
      %c0_27 = arith.constant 0 : index
      %c0_28 = arith.constant 0 : index
      %27 = vector.load %arg6[%c0_27, %c0_28] : memref<32x32xbf16, #tpu.memory_space<vmem>>, vector<32x32xbf16>
      %cst_29 = arith.constant dense<0.000000e+00> : vector<8x32xf32>
      %28 = tpu.matmul %21, %27, %cst_29 {dimension_numbers = #tpu.dot_dimension_numbers<[1], [0], [0], [1], [0, 0, 1, 1], [], []>} : vector<8x32xbf16>, vector<32x32xbf16>, vector<8x32xf32> -> vector<8x32xf32>
      %c0_30 = arith.constant 0 : index
      %c0_31 = arith.constant 0 : index
      %29 = vector.load %arg8[%c0_30, %c0_31] : memref<8x1xf32, #tpu.memory_space<vmem>>, vector<8x1xf32>
      %30 = vector.broadcast %29 : vector<8x1xf32> to vector<8x32xf32>
      %31 = arith.addf %28, %30 : vector<8x32xf32>
      %32 = arith.truncf %26 : vector<8x32xf32> to vector<8x32xbf16>
      %c0_32 = arith.constant 0 : index
      %c0_33 = arith.constant 0 : index
      %c0_34 = arith.constant 0 : index
      %33 = vector.load %arg9[%c0_32, %c0_33, %c0_34] : memref<1x8x32xbf16, #tpu.memory_space<vmem>>, vector<1x8x32xbf16>
      %34 = vector.shape_cast %33 : vector<1x8x32xbf16> to vector<8x32xbf16>
      %35 = vector.shape_cast %32 : vector<8x32xbf16> to vector<1x8x32xbf16>
      tpu.vector_store %arg9[%c0_32, %c0_33, %c0_34], %35 {strides = array<i32>} : memref<1x8x32xbf16, #tpu.memory_space<vmem>>, vector<1x8x32xbf16>,
      %36 = arith.truncf %31 : vector<8x32xf32> to vector<8x32xbf16>
      %c0_35 = arith.constant 0 : index
      %c0_36 = arith.constant 0 : index
      %c0_37 = arith.constant 0 : index
      %37 = vector.load %arg10[%c0_35, %c0_36, %c0_37] : memref<1x8x32xbf16, #tpu.memory_space<vmem>>, vector<1x8x32xbf16>
      %38 = vector.shape_cast %37 : vector<1x8x32xbf16> to vector<8x32xbf16>
      %39 = vector.shape_cast %36 : vector<8x32xbf16> to vector<1x8x32xbf16>
      tpu.vector_store %arg10[%c0_35, %c0_36, %c0_37], %39 {strides = array<i32>} : memref<1x8x32xbf16, #tpu.memory_space<vmem>>, vector<1x8x32xbf16>,
    } else {
    }
    return
  }
  func.func @transform_0(%arg0: i32, %arg1: i32) -> (i32, i32, i32) {
    %c0_i32 = arith.constant 0 : i32
    %c0_i32_0 = arith.constant 0 : i32
    return %arg0, %arg1, %c0_i32 : i32, i32, i32
  }
  func.func @transform_1(%arg0: i32, %arg1: i32) -> (i32, i32) {
    %c0_i32 = arith.constant 0 : i32
    %c0_i32_0 = arith.constant 0 : i32
    return %c0_i32, %arg1 : i32, i32
  }
  func.func @transform_2(%arg0: i32, %arg1: i32) -> (i32, i32) {
    %c0_i32 = arith.constant 0 : i32
    %c0_i32_0 = arith.constant 0 : i32
    return %c0_i32, %arg1 : i32, i32
  }
  func.func @transform_3(%arg0: i32, %arg1: i32) -> (i32, i32) {
    %c0_i32 = arith.constant 0 : i32
    %c0_i32_0 = arith.constant 0 : i32
    %c0_i32_1 = arith.constant 0 : i32
    return %c0_i32, %c0_i32_0 : i32, i32
  }
  func.func @transform_4(%arg0: i32, %arg1: i32) -> (i32, i32) {
    %c0_i32 = arith.constant 0 : i32
    %c0_i32_0 = arith.constant 0 : i32
    %c0_i32_1 = arith.constant 0 : i32
    return %c0_i32, %c0_i32_0 : i32, i32
  }
  func.func @transform_5(%arg0: i32, %arg1: i32) -> (i32, i32) {
    %c0_i32 = arith.constant 0 : i32
    %c0_i32_0 = arith.constant 0 : i32
    %c0_i32_1 = arith.constant 0 : i32
    return %c0_i32, %c0_i32_0 : i32, i32
  }
  func.func @transform_6(%arg0: i32, %arg1: i32) -> (i32, i32) {
    %c0_i32 = arith.constant 0 : i32
    %c0_i32_0 = arith.constant 0 : i32
    %c0_i32_1 = arith.constant 0 : i32
    return %c0_i32, %c0_i32_0 : i32, i32
  }
  func.func @transform_7(%arg0: i32, %arg1: i32) -> (i32, i32, i32) {
    %c0_i32 = arith.constant 0 : i32
    %c0_i32_0 = arith.constant 0 : i32
    %c0_i32_1 = arith.constant 0 : i32
    return %arg0, %c0_i32, %c0_i32_0 : i32, i32, i32
  }
  func.func @transform_8(%arg0: i32, %arg1: i32) -> (i32, i32, i32) {
    %c0_i32 = arith.constant 0 : i32
    %c0_i32_0 = arith.constant 0 : i32
    %c0_i32_1 = arith.constant 0 : i32
    return %arg0, %c0_i32, %c0_i32_0 : i32, i32, i32
  }
}

</mosaic_0001>

<llo_original>
// kernel: tpu_custom_call.1
$region0: #{tpu_custom_call.1}
  #allocation0 [shape = 'u32[]', space=smem, size = 0x4, offset = 0x4, fixed_abs, tag = 'smem constant byte address 0x4 - core index']
  #allocation1 [shape = 'u32[144,128]{1,0:T(1,128)}', space=vmem, size = 0x12000, scoped, tag = 'internal scratch']
  #allocation2 [shape = 'f32[8,32]{1,0:T(8,128)}', space=vmem, size = 0x1000, scoped, tag = 'scratch operand']
  #allocation3 [shape = 'f32[8,32]{1,0:T(8,128)}', space=vmem, size = 0x1000, scoped, tag = 'scratch operand']
  %s0 = inlined_call_operand.vmem [shape: bf16[2,16,32], index: 0, kind: input, shape index: {}]
  %s1 = inlined_call_operand.hbm [shape: bf16[8,16], index: 1, kind: input, shape index: {}]
  %s2 = inlined_call_operand.hbm [shape: bf16[8,16], index: 2, kind: input, shape index: {}]
  %s3 = inlined_call_operand.hbm [shape: bf16[32,32], index: 3, kind: input, shape index: {}]
  %s4 = inlined_call_operand.vmem [shape: bf16[32,32], index: 4, kind: input, shape index: {}]
  %s5 = inlined_call_operand.vmem [shape: f32[8,1], index: 5, kind: input, shape index: {}]
  %s6 = inlined_call_operand.vmem [shape: f32[8,1], index: 6, kind: input, shape index: {}]
  %s7 = inlined_call_operand.hbm [shape: bf16[2,8,32], index: 7, kind: output, shape index: {0}]
  %s8 = inlined_call_operand.hbm [shape: bf16[2,8,32], index: 8, kind: output, shape index: {1}]
  %9 = xla_tuple %s7, %s8
  %s10 = sld [smem:[#allocation0]]
  $region89: #{tpu_custom_call.1} parent=0
    _
  %s12 = ssub.s32 1, %s10
  %s13 = scalar_select 0, %s12, %s10
  $region1: #{tpu_custom_call.1} parent=0
    #allocation4 [shape = 'u8[2048]{0}', space=vmem, size = 0x800, scoped, tag = 'input window, operand 1, single buffered']
    #allocation5 [shape = 's32[2]{0}', space=sflag, size = 0x8, scoped, tag = 'scoped memory for tpu_custom_call.1']
    #allocation6 [shape = 's32[2]{0}', space=sflag, size = 0x8, scoped, tag = 'scoped memory for tpu_custom_call.1']
    #allocation7 [shape = 'u8[2048]{0}', space=vmem, size = 0x800, scoped, tag = 'input window, operand 2, single buffered']
    #allocation8 [shape = 's32[1]{0}', space=sflag, size = 0x4, scoped, tag = 'scoped memory for tpu_custom_call.1']
    #allocation9 [shape = 'u8[8192]{0}', space=vmem, size = 0x2000, scoped, tag = 'input window, operand 3, single buffered']
    #allocation10 [shape = 'u8[4096]{0}', space=vmem, size = 0x1000, scoped, tag = 'output window, operand 0']
    #allocation11 [shape = 'u8[4096]{0}', space=vmem, size = 0x1000, scoped, tag = 'output window, operand 1']
    #allocation12 [shape = 's32[2]{0}', space=sflag, size = 0x8, scoped, tag = 'scoped memory for tpu_custom_call.1']
    %14 = vsyncpa [#allocation5], 0
    %15 = vsyncpa [#allocation8], 0
    %16 = vsyncpa [#allocation6], 0
    %s17 = scalar_lea.sflag [#allocation6], 1
    %18 = vsyncpa %s17, 0
    %19 = vsyncpa [#allocation12], 0
    %s20 = scalar_lea.sflag [#allocation12], 1
    %21 = vsyncpa %s20, 0
    loop: start=0, step=1, limit=4
    $region2: #{tpu_custom_call.1} parent=1 // loop_pre_header
      _
    $region3: #{tpu_custom_call.1} parent=1 // loop_header
      %s23 = sphi 0, %s27
      %p24 = scmp.ge.s32.totalorder %s23, 4
      %s30 = sphi 0, %s42
      %s31 = sphi 0, %s38
      %s32 = sphi 0, %s30
      %s33 = sphi 0, %s31
      %s34 = sphi 0, %s32
      %s35 = sphi 0, %s33
      %s47 = sphi 0, %s49
      %s50 = sphi 0, %s47
      %s51 = sphi 0, %s50
      %s67 = sphi 0, %s51
      %s73 = sphi 0, %s75
      %s76 = sphi 0, %s73
      %s77 = sphi 0, %s76
      %s93 = sphi 0, %s77
      %s99 = sphi 0, %s101
      %s102 = sphi 0, %s99
      %s103 = sphi 0, %s102
      %s119 = sphi 0, %s103
      %s123 = sphi 0, %s123
      %s125 = sphi 0, %s123
      %s126 = sphi 0, %s125
      %s140 = sphi 0, %s126
      %s144 = sphi 0, %s144
      %s146 = sphi 0, %s144
      %s147 = sphi 0, %s146
      %s161 = sphi 0, %s147
      %s165 = sphi 0, %s165
      %s167 = sphi 0, %s165
      %s168 = sphi 0, %s167
      %s182 = sphi 0, %s168
      %s186 = sphi 0, %s186
      %s188 = sphi 0, %s186
      %s189 = sphi 0, %s188
      %s203 = sphi 0, %s189
      %s209 = sphi 0, %s211
      %s212 = sphi 0, %s209
      %s213 = sphi 0, %s212
      %s229 = sphi 0, %s213
      %s235 = sphi 0, %s237
      %s238 = sphi 0, %s235
      %s239 = sphi 0, %s238
      %s255 = sphi 0, %s239
    $region4: #{tpu_custom_call.1} parent=1 // loop_header_branch
      %26 = sbr.rel (%p24) target = $region8
    $region5: #{tpu_custom_call.1} parent=1 // loop_body
      %s28 = ssub.s32 %s23, 1
      %s29 = ssub.s32 %s23, 2
      %s36 = sadd.s32 1, %s31
      %p37 = scmp.ge.s32.totalorder %s36, 1
      %s38 = scalar_select %p37, 0, %s36
      %s39 = sadd.s32 1, %s30
      %s40 = scalar_select %p37, %s39, %s30
      %p41 = scmp.ge.s32.totalorder %s40, 2
      %s42 = scalar_select %p41, 0, %s40
      %s43 = ssub.s32 %s30, %s42
      %s44 = ssub.s32 %s31, %s38
      %s45 = sor.u32 %s43, %s44
      %p46 = scmp.eq.s32.totalorder %s45, 0
      %s48 = sadd.s32 %s47, 1
      %s49 = scalar_select %p46, %s47, %s48
      %p52 = pneg %p46
      %p53 = scmp.eq.s32.totalorder %s23, 1
      %p54 = por %p52, %p53
      %p55 = scmp.ne.s32.totalorder %s47, %s50
      %p56 = scmp.eq.s32.totalorder %s23, 0
      %p57 = por %p55, %p56
      %p58 = scmp.ne.s32.totalorder %s47, %s50
      %p59 = scmp.eq.s32.totalorder %s28, 1
      %p60 = por %p58, %p59
      %p61 = scmp.ne.s32.totalorder %s50, %s51
      %p62 = scmp.eq.s32.totalorder %s28, 0
      %p63 = por %p61, %p62
      %p64 = scmp.ne.s32.totalorder %s50, %s51
      %p65 = scmp.eq.s32.totalorder %s29, 1
      %p66 = por %p64, %p65
      %p68 = scmp.ne.s32.totalorder %s51, %s67
      %p69 = scmp.eq.s32.totalorder %s29, 0
      %p70 = por %p68, %p69
      %s71 = ssub.s32 %s31, %s38
      %p72 = scmp.eq.s32.totalorder %s71, 0
      %s74 = sadd.s32 %s73, 1
      %s75 = scalar_select %p72, %s73, %s74
      %p78 = pneg %p72
      %p79 = scmp.eq.s32.totalorder %s23, 1
      %p80 = por %p78, %p79
      %p81 = scmp.ne.s32.totalorder %s73, %s76
      %p82 = scmp.eq.s32.totalorder %s23, 0
      %p83 = por %p81, %p82
      %p84 = scmp.ne.s32.totalorder %s73, %s76
      %p85 = scmp.eq.s32.totalorder %s28, 1
      %p86 = por %p84, %p85
      %p87 = scmp.ne.s32.totalorder %s76, %s77
      %p88 = scmp.eq.s32.totalorder %s28, 0
      %p89 = por %p87, %p88
      %p90 = scmp.ne.s32.totalorder %s76, %s77
      %p91 = scmp.eq.s32.totalorder %s29, 1
      %p92 = por %p90, %p91
      %p94 = scmp.ne.s32.totalorder %s77, %s93
      %p95 = scmp.eq.s32.totalorder %s29, 0
      %p96 = por %p94, %p95
      %s97 = ssub.s32 %s31, %s38
      %p98 = scmp.eq.s32.totalorder %s97, 0
      %s100 = sadd.s32 %s99, 1
      %s101 = scalar_select %p98, %s99, %s100
      %p104 = pneg %p98
      %p105 = scmp.eq.s32.totalorder %s23, 1
      %p106 = por %p104, %p105
      %p107 = scmp.ne.s32.totalorder %s99, %s102
      %p108 = scmp.eq.s32.totalorder %s23, 0
      %p109 = por %p107, %p108
      %p110 = scmp.ne.s32.totalorder %s99, %s102
      %p111 = scmp.eq.s32.totalorder %s28, 1
      %p112 = por %p110, %p111
      %p113 = scmp.ne.s32.totalorder %s102, %s103
      %p114 = scmp.eq.s32.totalorder %s28, 0
      %p115 = por %p113, %p114
      %p116 = scmp.ne.s32.totalorder %s102, %s103
      %p117 = scmp.eq.s32.totalorder %s29, 1
      %p118 = por %p116, %p117
      %p120 = scmp.ne.s32.totalorder %s103, %s119
      %p121 = scmp.eq.s32.totalorder %s29, 0
      %p122 = por %p120, %p121
      %s124 = sadd.s32 %s123, 1
      %p127 = scmp.eq.s32.totalorder %s23, 1
      %p128 = scmp.ne.s32.totalorder %s123, %s125
      %p129 = scmp.eq.s32.totalorder %s23, 0
      %p130 = por %p128, %p129
      %p131 = scmp.ne.s32.totalorder %s123, %s125
      %p132 = scmp.eq.s32.totalorder %s28, 1
      %p133 = por %p131, %p132
      %p134 = scmp.ne.s32.totalorder %s125, %s126
      %p135 = scmp.eq.s32.totalorder %s28, 0
      %p136 = por %p134, %p135
      %p137 = scmp.ne.s32.totalorder %s125, %s126
      %p138 = scmp.eq.s32.totalorder %s29, 1
      %p139 = por %p137, %p138
      %p141 = scmp.ne.s32.totalorder %s126, %s140
      %p142 = scmp.eq.s32.totalorder %s29, 0
      %p143 = por %p141, %p142
      %s145 = sadd.s32 %s144, 1
      %p148 = scmp.eq.s32.totalorder %s23, 1
      %p149 = scmp.ne.s32.totalorder %s144, %s146
      %p150 = scmp.eq.s32.totalorder %s23, 0
      %p151 = por %p149, %p150
      %p152 = scmp.ne.s32.totalorder %s144, %s146
      %p153 = scmp.eq.s32.totalorder %s28, 1
      %p154 = por %p152, %p153
      %p155 = scmp.ne.s32.totalorder %s146, %s147
      %p156 = scmp.eq.s32.totalorder %s28, 0
      %p157 = por %p155, %p156
      %p158 = scmp.ne.s32.totalorder %s146, %s147
      %p159 = scmp.eq.s32.totalorder %s29, 1
      %p160 = por %p158, %p159
      %p162 = scmp.ne.s32.totalorder %s147, %s161
      %p163 = scmp.eq.s32.totalorder %s29, 0
      %p164 = por %p162, %p163
      %s166 = sadd.s32 %s165, 1
      %p169 = scmp.eq.s32.totalorder %s23, 1
      %p170 = scmp.ne.s32.totalorder %s165, %s167
      %p171 = scmp.eq.s32.totalorder %s23, 0
      %p172 = por %p170, %p171
      %p173 = scmp.ne.s32.totalorder %s165, %s167
      %p174 = scmp.eq.s32.totalorder %s28, 1
      %p175 = por %p173, %p174
      %p176 = scmp.ne.s32.totalorder %s167, %s168
      %p177 = scmp.eq.s32.totalorder %s28, 0
      %p178 = por %p176, %p177
      %p179 = scmp.ne.s32.totalorder %s167, %s168
      %p180 = scmp.eq.s32.totalorder %s29, 1
      %p181 = por %p179, %p180
      %p183 = scmp.ne.s32.totalorder %s168, %s182
      %p184 = scmp.eq.s32.totalorder %s29, 0
      %p185 = por %p183, %p184
      %s187 = sadd.s32 %s186, 1
      %p190 = scmp.eq.s32.totalorder %s23, 1
      %p191 = scmp.ne.s32.totalorder %s186, %s188
      %p192 = scmp.eq.s32.totalorder %s23, 0
      %p193 = por %p191, %p192
      %p194 = scmp.ne.s32.totalorder %s186, %s188
      %p195 = scmp.eq.s32.totalorder %s28, 1
      %p196 = por %p194, %p195
      %p197 = scmp.ne.s32.totalorder %s188, %s189
      %p198 = scmp.eq.s32.totalorder %s28, 0
      %p199 = por %p197, %p198
      %p200 = scmp.ne.s32.totalorder %s188, %s189
      %p201 = scmp.eq.s32.totalorder %s29, 1
      %p202 = por %p200, %p201
      %p204 = scmp.ne.s32.totalorder %s189, %s203
      %p205 = scmp.eq.s32.totalorder %s29, 0
      %p206 = por %p204, %p205
      %s207 = ssub.s32 %s30, %s42
      %p208 = scmp.eq.s32.totalorder %s207, 0
      %s210 = sadd.s32 %s209, 1
      %s211 = scalar_select %p208, %s209, %s210
      %p214 = pneg %p208
      %p215 = scmp.eq.s32.totalorder %s23, 1
      %p216 = por %p214, %p215
      %p217 = scmp.ne.s32.totalorder %s209, %s212
      %p218 = scmp.eq.s32.totalorder %s23, 0
      %p219 = por %p217, %p218
      %p220 = scmp.ne.s32.totalorder %s209, %s212
      %p221 = scmp.eq.s32.totalorder %s28, 1
      %p222 = por %p220, %p221
      %p223 = scmp.ne.s32.totalorder %s212, %s213
      %p224 = scmp.eq.s32.totalorder %s28, 0
      %p225 = por %p223, %p224
      %p226 = scmp.ne.s32.totalorder %s212, %s213
      %p227 = scmp.eq.s32.totalorder %s29, 1
      %p228 = por %p226, %p227
      %p230 = scmp.ne.s32.totalorder %s213, %s229
      %p231 = scmp.eq.s32.totalorder %s29, 0
      %p232 = por %p230, %p231
      %s233 = ssub.s32 %s30, %s42
      %p234 = scmp.eq.s32.totalorder %s233, 0
      %s236 = sadd.s32 %s235, 1
      %s237 = scalar_select %p234, %s235, %s236
      %p240 = pneg %p234
      %p241 = scmp.eq.s32.totalorder %s23, 1
      %p242 = por %p240, %p241
      %p243 = scmp.ne.s32.totalorder %s235, %s238
      %p244 = scmp.eq.s32.totalorder %s23, 0
      %p245 = por %p243, %p244
      %p246 = scmp.ne.s32.totalorder %s235, %s238
      %p247 = scmp.eq.s32.totalorder %s28, 1
      %p248 = por %p246, %p247
      %p249 = scmp.ne.s32.totalorder %s238, %s239
      %p250 = scmp.eq.s32.totalorder %s28, 0
      %p251 = por %p249, %p250
      %p252 = scmp.ne.s32.totalorder %s238, %s239
      %p253 = scmp.eq.s32.totalorder %s29, 1
      %p254 = por %p252, %p253
      %p256 = scmp.ne.s32.totalorder %s239, %s255
      %p257 = scmp.eq.s32.totalorder %s29, 0
      %p258 = por %p256, %p257
      %p259 = scmp.le.s32.totalorder 1, %s23
      %p260 = scmp.lt.s32.totalorder %s23, 3
      %p261 = pnand %p259, %p260
      %p262 = pneg %p261
      // Predicated region
      $region9: #{tpu_custom_call.1} parent=5 // pred_check
        _
      $region10: #{tpu_custom_call.1} parent=5 // pred_check_branch
        %264 = sbr.rel (%p261) target = $region12
      $region11: #{tpu_custom_call.1} parent=5 // pred_region
        %s265 = ssub.s32 %s23, 1
        // Predicated region
        $region13: #{tpu_custom_call.1} parent=11 // pred_check
          %p266 = pneg %p89
        $region14: #{tpu_custom_call.1} parent=11 // pred_check_branch
          %268 = sbr.rel (%p266) target = $region16
        $region15: #{tpu_custom_call.1} parent=11 // pred_region
          %s270 = ssub.s32 64, 64
          %271 = vsyncadd [#allocation5], %s270
          %s272 = smul.addr %s33, 64
          %s273 = scalar_lea.hbm %s1, %s272
          %s275 = sshll.u32 [#allocation4], 4
          %s276 = int_to_ptr.vmem [resolvable:$true] %s275
          %278 = dma.hbm_to_vmem [thread:$0]  %s273, 64, %s276, [#allocation5]
        $region16: #{tpu_custom_call.1} parent=11 // pred_fallthru
          _
        // Predicated region
        $region17: #{tpu_custom_call.1} parent=11 // pred_check
          %p279 = pneg %p115
        $region18: #{tpu_custom_call.1} parent=11 // pred_check_branch
          %281 = sbr.rel (%p279) target = $region20
        $region19: #{tpu_custom_call.1} parent=11 // pred_region
          %s283 = ssub.s32 64, 64
          %284 = vsyncadd [#allocation8], %s283
          %s285 = smul.addr %s33, 64
          %s286 = scalar_lea.hbm %s2, %s285
          %s288 = sshll.u32 [#allocation7], 4
          %s289 = int_to_ptr.vmem [resolvable:$true] %s288
          %291 = dma.hbm_to_vmem [thread:$0]  %s286, 64, %s289, [#allocation8]
        $region20: #{tpu_custom_call.1} parent=11 // pred_fallthru
          _
        // Predicated region
        $region21: #{tpu_custom_call.1} parent=11 // pred_check
          %p292 = pneg %p136
        $region22: #{tpu_custom_call.1} parent=11 // pred_check_branch
          %294 = sbr.rel (%p292) target = $region24
        $region23: #{tpu_custom_call.1} parent=11 // pred_region
          %s296 = ssub.s32 256, 256
          %297 = vsyncadd [#allocation8], %s296
          %s298 = sshll.u32 [#allocation9], 4
          %s299 = int_to_ptr.vmem [resolvable:$true] %s298
          %304 = dma.hbm_to_vmem [thread:$0]  %s3, 256, %s299, [#allocation8], 64, 64, 4
        $region24: #{tpu_custom_call.1} parent=11 // pred_fallthru
          _
        // Predicated region
        $region25: #{tpu_custom_call.1} parent=11 // pred_check
          %p305 = pneg %p157
        $region26: #{tpu_custom_call.1} parent=11 // pred_check_branch
          %307 = sbr.rel (%p305) target = $region28
        $region27: #{tpu_custom_call.1} parent=11 // pred_region
          _
        $region28: #{tpu_custom_call.1} parent=11 // pred_fallthru
          _
        // Predicated region
        $region29: #{tpu_custom_call.1} parent=11 // pred_check
          %p308 = pneg %p178
        $region30: #{tpu_custom_call.1} parent=11 // pred_check_branch
          %310 = sbr.rel (%p308) target = $region32
        $region31: #{tpu_custom_call.1} parent=11 // pred_region
          _
        $region32: #{tpu_custom_call.1} parent=11 // pred_fallthru
          _
        // Predicated region
        $region33: #{tpu_custom_call.1} parent=11 // pred_check
          %p311 = pneg %p199
        $region34: #{tpu_custom_call.1} parent=11 // pred_check_branch
          %313 = sbr.rel (%p311) target = $region36
        $region35: #{tpu_custom_call.1} parent=11 // pred_region
          _
        $region36: #{tpu_custom_call.1} parent=11 // pred_fallthru
          _
      $region12: #{tpu_custom_call.1} parent=5 // pred_fallthru
        _
      %p314 = scmp.lt.s32.totalorder %s23, 2
      // Predicated region
      $region37: #{tpu_custom_call.1} parent=5 // pred_check
        %p315 = pneg %p314
      $region38: #{tpu_custom_call.1} parent=5 // pred_check_branch
        %317 = sbr.rel (%p315) target = $region40
      $region39: #{tpu_custom_call.1} parent=5 // pred_region
        // Predicated region
        $region41: #{tpu_custom_call.1} parent=39 // pred_check
          %p318 = pneg %p57
        $region42: #{tpu_custom_call.1} parent=39 // pred_check_branch
          %320 = sbr.rel (%p318) target = $region44
        $region43: #{tpu_custom_call.1} parent=39 // pred_region
          %s321 = smul.u32 2, %s31
          %p322 = scmp.lt.s32.totalorder %s30, 1
          %s323 = scalar_select %p322, %s30, 1
          %p324 = scmp.lt.s32.totalorder %s321, 1
          %s325 = scalar_select %p324, %s321, 1
          %s326 = smul.addr %s323, 2
          %s327 = sadd.s32 %s325, %s326
          %s328 = smul.addr %s327, 4
          %s329 = scalar_lea.vmem %s0, %s328
          %s330 = smul.u32 2, %s31
        $region44: #{tpu_custom_call.1} parent=39 // pred_fallthru
          _
      $region40: #{tpu_custom_call.1} parent=5 // pred_fallthru
        _
      %p331 = scmp.le.s32.totalorder 1, %s23
      %p332 = scmp.lt.s32.totalorder %s23, 3
      %p333 = pnand %p331, %p332
      %p334 = pneg %p333
      // Predicated region
      $region45: #{tpu_custom_call.1} parent=5 // pred_check
        _
      $region46: #{tpu_custom_call.1} parent=5 // pred_check_branch
        %336 = sbr.rel (%p333) target = $region48
      $region47: #{tpu_custom_call.1} parent=5 // pred_region
        %s337 = ssub.s32 %s23, 1
        // Predicated region
        $region49: #{tpu_custom_call.1} parent=47 // pred_check
          %p338 = pneg %p89
        $region50: #{tpu_custom_call.1} parent=47 // pred_check_branch
          %340 = sbr.rel (%p338) target = $region52
        $region51: #{tpu_custom_call.1} parent=47 // pred_region
          %341 = dma.done [#allocation5], 64
        $region52: #{tpu_custom_call.1} parent=47 // pred_fallthru
          _
        // Predicated region
        $region53: #{tpu_custom_call.1} parent=47 // pred_check
          %p342 = pneg %p115
        $region54: #{tpu_custom_call.1} parent=47 // pred_check_branch
          %344 = sbr.rel (%p342) target = $region56
        $region55: #{tpu_custom_call.1} parent=47 // pred_region
          %345 = dma.done [#allocation8], 64
        $region56: #{tpu_custom_call.1} parent=47 // pred_fallthru
          _
        // Predicated region
        $region57: #{tpu_custom_call.1} parent=47 // pred_check
          %p346 = pneg %p136
        $region58: #{tpu_custom_call.1} parent=47 // pred_check_branch
          %348 = sbr.rel (%p346) target = $region60
        $region59: #{tpu_custom_call.1} parent=47 // pred_region
          %349 = dma.done [#allocation8], 256
        $region60: #{tpu_custom_call.1} parent=47 // pred_fallthru
          _
        %s350 = smul.u32 2, %s33
        %p351 = scmp.lt.s32.totalorder %s32, 1
        %s352 = scalar_select %p351, %s32, 1
        %p353 = scmp.lt.s32.totalorder %s350, 1
        %s354 = scalar_select %p353, %s350, 1
        %s355 = smul.addr %s352, 2
        %s356 = sadd.s32 %s354, %s355
        %s357 = smul.addr %s356, 4
        %s358 = scalar_lea.vmem %s0, %s357
        %p359 = pneg %p63
        %p360 = pneg %p60
        %p361 = pneg %p89
        %p362 = pneg %p86
        %p363 = pneg %p115
        %p364 = pneg %p112
        %p365 = pneg %p136
        %p366 = pneg %p133
        %p367 = pneg %p157
        %p368 = pneg %p154
        %p369 = pneg %p178
        %p370 = pneg %p175
        %p371 = pneg %p199
        %p372 = pneg %p196
        %p373 = pneg %p225
        %p374 = pneg %p222
        %s375 = sand.u32 %s212, 1
        %s376 = scalar_lea.sflag [#allocation6], %s375
        %s377 = sand.u32 %s212, 1
        %s378 = smul.addr %s377, 4
        %s379 = scalar_lea.vmem [#allocation10], %s378
        %p380 = pneg %p251
        %p381 = pneg %p248
        %s382 = sand.u32 %s238, 1
        %s383 = scalar_lea.sflag [#allocation12], %s382
        %s384 = sand.u32 %s238, 1
        %s385 = smul.addr %s384, 4
        %s386 = scalar_lea.vmem [#allocation11], %s385
        %s387 = smul.u32 2, %s33
        %p388 = scmp.lt.s32.totalorder %s32, 1
        %s389 = scalar_select %p388, %s32, 1
        %p390 = scmp.lt.s32.totalorder %s387, 1
        %s391 = scalar_select %p390, %s387, 1
        %s392 = smul.addr %s389, 2
        %s393 = sadd.s32 %s391, %s392
        %s394 = smul.addr %s393, 4
        %s395 = scalar_lea.vmem %s0, %s394
        %s396 = smul.u32 2, %s33
        %p398 = scmp.eq.s32.totalorder %s33, 0
        // Predicated region
        $region61: #{tpu_custom_call.1} parent=47 // pred_check
          %p399 = pneg %p398
        $region62: #{tpu_custom_call.1} parent=47 // pred_check_branch
          %401 = sbr.rel (%p399) target = $region64
        $region63: #{tpu_custom_call.1} parent=47 // pred_region
          %vm402 = vcmask 261120
          %403 = vst.msk [vmem:[#allocation2] sm:$0xff] %vm402, 0.0
          %404 = vst.msk [vmem:[#allocation3] sm:$0xff] %vm402, 0.0
        $region64: #{tpu_custom_call.1} parent=47 // pred_fallthru
          _
        %v405 = vld [vmem:[%s395] sm:$0xf]
        %v406 = vld [vmem:[%s395 + $0x4] sm:$0xf]
        %v407 = vld [vmem:[#allocation2] sm:$0xff]
        %v408 = vld [vmem:[#allocation4] sm:$0xf]
        %v411 = vunpack.c.l.b16 %v405
        %v412 = vunpack.c.l.b16 %v406
        %v413 = vpack.c.b16 %v412, %v411
        %vm415 = vcmask 130048
        %v417 = vsel %vm415, %v408, 0
        %419 = vmatprep.subr.bf16.mxu0 0
        %420 = vmatpush1.bf16.msra.mxu0 %v413
        %421 = vmatprep.subr.bf16.mxu0 0
        %422 = vmatpush1.bf16.msra.mxu0 0
        %423 = vmatprep.subr.bf16.mxu0 0
        %424 = vmatpush1.bf16.msra.mxu0 0
        %425 = vmatprep.subr.bf16.mxu0 0
        %426 = vmatpush1.bf16.msra.mxu0 0
        %427 = vmatprep.subr.bf16.mxu0 0
        %428 = vmatpush1.bf16.msra.mxu0 0
        %429 = vmatprep.subr.bf16.mxu0 0
        %430 = vmatpush1.bf16.msra.mxu0 0
        %431 = vmatprep.subr.bf16.mxu0 0
        %432 = vmatpush1.bf16.msra.mxu0 0
        %433 = vmatprep.subr.bf16.mxu0 0
        %434 = vmatpush1.bf16.msra.mxu0 0
        %435 = vmatprep.subr.bf16.mxu0 0
        %436 = vmatpush1.bf16.msra.mxu0 0
        %437 = vmatprep.subr.bf16.mxu0 0
        %438 = vmatpush1.bf16.msra.mxu0 0
        %439 = vmatprep.subr.bf16.mxu0 0
        %440 = vmatpush1.bf16.msra.mxu0 0
        %441 = vmatprep.subr.bf16.mxu0 0
        %442 = vmatpush1.bf16.msra.mxu0 0
        %443 = vmatprep.subr.bf16.mxu0 0
        %444 = vmatpush1.bf16.msra.mxu0 0
        %445 = vmatprep.subr.bf16.mxu0 0
        %446 = vmatpush1.bf16.msra.mxu0 0
        %447 = vmatprep.subr.bf16.mxu0 0
        %448 = vmatpush1.bf16.msra.mxu0 0
        %449 = vmatprep.subr.bf16.mxu0 0
        %450 = vmatpush1.bf16.msra.mxu0 0
        %451 = vmatprep.mubr.bf16.mxu0 0
        %452 = vmatmul.mubr.bf16.gmra.mrb[0].mxu0 %v417
        %v453 = vpop.f32.mrb[0].mxu0
        %v454 = vadd.f32 0.0, %v453
        %v455 = vpop.f32.mrb[0].mxu0
        %v456 = vpop.f32.mrb[0].mxu0
        %v457 = vpop.f32.mrb[0].mxu0
        %458 = vdwg.mxu0
        %v459 = vadd.f32 %v407, %v454
        %vm460 = vcmask 261120
        %461 = vst.msk [vmem:[#allocation2] sm:$0xff] %vm460, %v459
        %v462 = vld [vmem:[#allocation3] sm:$0xff]
        %v463 = vld [vmem:[#allocation7] sm:$0xf]
        %v465 = vsel %vm415, %v463, 0
        %467 = vmatprep.subr.bf16.mxu0 0
        %468 = vmatpush1.bf16.msra.mxu0 %v413
        %469 = vmatprep.subr.bf16.mxu0 0
        %470 = vmatpush1.bf16.msra.mxu0 0
        %471 = vmatprep.subr.bf16.mxu0 0
        %472 = vmatpush1.bf16.msra.mxu0 0
        %473 = vmatprep.subr.bf16.mxu0 0
        %474 = vmatpush1.bf16.msra.mxu0 0
        %475 = vmatprep.subr.bf16.mxu0 0
        %476 = vmatpush1.bf16.msra.mxu0 0
        %477 = vmatprep.subr.bf16.mxu0 0
        %478 = vmatpush1.bf16.msra.mxu0 0
        %479 = vmatprep.subr.bf16.mxu0 0
        %480 = vmatpush1.bf16.msra.mxu0 0
        %481 = vmatprep.subr.bf16.mxu0 0
        %482 = vmatpush1.bf16.msra.mxu0 0
        %483 = vmatprep.subr.bf16.mxu0 0
        %484 = vmatpush1.bf16.msra.mxu0 0
        %485 = vmatprep.subr.bf16.mxu0 0
        %486 = vmatpush1.bf16.msra.mxu0 0
        %487 = vmatprep.subr.bf16.mxu0 0
        %488 = vmatpush1.bf16.msra.mxu0 0
        %489 = vmatprep.subr.bf16.mxu0 0
        %490 = vmatpush1.bf16.msra.mxu0 0
        %491 = vmatprep.subr.bf16.mxu0 0
        %492 = vmatpush1.bf16.msra.mxu0 0
        %493 = vmatprep.subr.bf16.mxu0 0
        %494 = vmatpush1.bf16.msra.mxu0 0
        %495 = vmatprep.subr.bf16.mxu0 0
        %496 = vmatpush1.bf16.msra.mxu0 0
        %497 = vmatprep.subr.bf16.mxu0 0
        %498 = vmatpush1.bf16.msra.mxu0 0
        %499 = vmatprep.mubr.bf16.mxu0 0
        %500 = vmatmul.mubr.bf16.gmra.mrb[0].mxu0 %v465
        %v501 = vpop.f32.mrb[0].mxu0
        %v502 = vadd.f32 0.0, %v501
        %v503 = vpop.f32.mrb[0].mxu0
        %v504 = vpop.f32.mrb[0].mxu0
        %v505 = vpop.f32.mrb[0].mxu0
        %506 = vdwg.mxu0
        %v507 = vadd.f32 %v462, %v502
        %508 = vst.msk [vmem:[#allocation3] sm:$0xff] %vm460, %v507
        // Predicated region
        $region65: #{tpu_custom_call.1} parent=47 // pred_check
          %p509 = pneg %p398
        $region66: #{tpu_custom_call.1} parent=47 // pred_check_branch
          %511 = sbr.rel (%p509) target = $region68
        $region67: #{tpu_custom_call.1} parent=47 // pred_region
          %v512 = vld [vmem:[#allocation2] sm:$0xff]
          %v513 = vpack.c.bf16 %v512, %v512
          %v514 = vld [vmem:[#allocation3] sm:$0xff]
          %v515 = vpack.c.bf16 %v514, %v514
          %v516 = vld [vmem:[#allocation9] sm:$0xf]
          %v517 = vld [vmem:[#allocation9 + $0x4] sm:$0xf]
          %v518 = vld [vmem:[#allocation9 + $0x8] sm:$0xf]
          %v519 = vld [vmem:[#allocation9 + $0xc] sm:$0xf]
          %v520 = vld [vmem:[%s5] sm:$0xff]
          %522 = vset.pattern.permute.xlu0 0
          %523 = vperm.xlu0 %522, %v520
          %v524 = vpop.permute.xlu0 %523
          %v530 = vunpack.c.l.b16 %v516
          %v531 = vunpack.c.l.b16 %v517
          %v532 = vunpack.c.l.b16 %v518
          %v533 = vunpack.c.l.b16 %v519
          %v534 = vpack.c.b16 %v531, %v530
          %v535 = vpack.c.b16 %v533, %v532
          %v539 = vsel %vm460, %v513, 0
          %541 = vmatprep.subr.bf16.mxu0 0
          %542 = vmatpush1.bf16.msra.mxu0 %v534
          %543 = vmatprep.subr.bf16.mxu0 0
          %544 = vmatpush1.bf16.msra.mxu0 %v535
          %545 = vmatprep.subr.bf16.mxu0 0
          %546 = vmatpush1.bf16.msra.mxu0 0
          %547 = vmatprep.subr.bf16.mxu0 0
          %548 = vmatpush1.bf16.msra.mxu0 0
          %549 = vmatprep.subr.bf16.mxu0 0
          %550 = vmatpush1.bf16.msra.mxu0 0
          %551 = vmatprep.subr.bf16.mxu0 0
          %552 = vmatpush1.bf16.msra.mxu0 0
          %553 = vmatprep.subr.bf16.mxu0 0
          %554 = vmatpush1.bf16.msra.mxu0 0
          %555 = vmatprep.subr.bf16.mxu0 0
          %556 = vmatpush1.bf16.msra.mxu0 0
          %557 = vmatprep.subr.bf16.mxu0 0
          %558 = vmatpush1.bf16.msra.mxu0 0
          %559 = vmatprep.subr.bf16.mxu0 0
          %560 = vmatpush1.bf16.msra.mxu0 0
          %561 = vmatprep.subr.bf16.mxu0 0
          %562 = vmatpush1.bf16.msra.mxu0 0
          %563 = vmatprep.subr.bf16.mxu0 0
          %564 = vmatpush1.bf16.msra.mxu0 0
          %565 = vmatprep.subr.bf16.mxu0 0
          %566 = vmatpush1.bf16.msra.mxu0 0
          %567 = vmatprep.subr.bf16.mxu0 0
          %568 = vmatpush1.bf16.msra.mxu0 0
          %569 = vmatprep.subr.bf16.mxu0 0
          %570 = vmatpush1.bf16.msra.mxu0 0
          %571 = vmatprep.subr.bf16.mxu0 0
          %572 = vmatpush1.bf16.msra.mxu0 0
          %573 = vmatprep.mubr.bf16.mxu0 0
          %574 = vmatmul.mubr.bf16.gmra.mrb[0].mxu0 %v539
          %v575 = vpop.f32.mrb[0].mxu0
          %v576 = vadd.f32 %v524, %v575
          %v577 = vpop.f32.mrb[0].mxu0
          %v578 = vpop.f32.mrb[0].mxu0
          %v579 = vpop.f32.mrb[0].mxu0
          %580 = vdwg.mxu0
          %v581 = vld [vmem:[%s4] sm:$0xf]
          %v582 = vld [vmem:[%s4 + $0x4] sm:$0xf]
          %v583 = vld [vmem:[%s4 + $0x8] sm:$0xf]
          %v584 = vld [vmem:[%s4 + $0xc] sm:$0xf]
          %v585 = vld [vmem:[%s6] sm:$0xff]
          %587 = vset.pattern.permute.xlu0 0
          %588 = vperm.xlu0 %587, %v585
          %v589 = vpop.permute.xlu0 %588
          %v595 = vunpack.c.l.b16 %v581
          %v596 = vunpack.c.l.b16 %v582
          %v597 = vunpack.c.l.b16 %v583
          %v598 = vunpack.c.l.b16 %v584
          %v599 = vpack.c.b16 %v596, %v595
          %v600 = vpack.c.b16 %v598, %v597
          %v604 = vsel %vm460, %v515, 0
          %606 = vmatprep.subr.bf16.mxu0 0
          %607 = vmatpush1.bf16.msra.mxu0 %v599
          %608 = vmatprep.subr.bf16.mxu0 0
          %609 = vmatpush1.bf16.msra.mxu0 %v600
          %610 = vmatprep.subr.bf16.mxu0 0
          %611 = vmatpush1.bf16.msra.mxu0 0
          %612 = vmatprep.subr.bf16.mxu0 0
          %613 = vmatpush1.bf16.msra.mxu0 0
          %614 = vmatprep.subr.bf16.mxu0 0
          %615 = vmatpush1.bf16.msra.mxu0 0
          %616 = vmatprep.subr.bf16.mxu0 0
          %617 = vmatpush1.bf16.msra.mxu0 0
          %618 = vmatprep.subr.bf16.mxu0 0
          %619 = vmatpush1.bf16.msra.mxu0 0
          %620 = vmatprep.subr.bf16.mxu0 0
          %621 = vmatpush1.bf16.msra.mxu0 0
          %622 = vmatprep.subr.bf16.mxu0 0
          %623 = vmatpush1.bf16.msra.mxu0 0
          %624 = vmatprep.subr.bf16.mxu0 0
          %625 = vmatpush1.bf16.msra.mxu0 0
          %626 = vmatprep.subr.bf16.mxu0 0
          %627 = vmatpush1.bf16.msra.mxu0 0
          %628 = vmatprep.subr.bf16.mxu0 0
          %629 = vmatpush1.bf16.msra.mxu0 0
          %630 = vmatprep.subr.bf16.mxu0 0
          %631 = vmatpush1.bf16.msra.mxu0 0
          %632 = vmatprep.subr.bf16.mxu0 0
          %633 = vmatpush1.bf16.msra.mxu0 0
          %634 = vmatprep.subr.bf16.mxu0 0
          %635 = vmatpush1.bf16.msra.mxu0 0
          %636 = vmatprep.subr.bf16.mxu0 0
          %637 = vmatpush1.bf16.msra.mxu0 0
          %638 = vmatprep.mubr.bf16.mxu0 0
          %639 = vmatmul.mubr.bf16.gmra.mrb[0].mxu0 %v604
          %v640 = vpop.f32.mrb[0].mxu0
          %v641 = vadd.f32 %v589, %v640
          %v642 = vpop.f32.mrb[0].mxu0
          %v643 = vpop.f32.mrb[0].mxu0
          %v644 = vpop.f32.mrb[0].mxu0
          %645 = vdwg.mxu0
          %v646 = vpack.c.bf16 %v576, %v576
          %vm647 = vcmask 257024
          %648 = vst.msk [vmem:[%s379] sm:$0xf] %vm647, %v646
          %v649 = vpack.c.bf16 %v641, %v641
          %650 = vst.msk [vmem:[%s386] sm:$0xf] %vm647, %v649
        $region68: #{tpu_custom_call.1} parent=47 // pred_fallthru
          _
        %s651 = sand.u32 %s212, 1
        %s652 = scalar_lea.sflag [#allocation6], %s651
        %s653 = sand.u32 %s212, 1
        %s654 = smul.addr %s653, 4
        %s655 = scalar_lea.vmem [#allocation10], %s654
        %s656 = sand.u32 %s238, 1
        %s657 = scalar_lea.sflag [#allocation12], %s656
        %s658 = sand.u32 %s238, 1
        %s659 = smul.addr %s658, 4
        %s660 = scalar_lea.vmem [#allocation11], %s659
        // Predicated region
        $region69: #{tpu_custom_call.1} parent=47 // pred_check
          %p661 = pneg %p222
        $region70: #{tpu_custom_call.1} parent=47 // pred_check_branch
          %663 = sbr.rel (%p661) target = $region72
        $region71: #{tpu_custom_call.1} parent=47 // pred_region
          %s665 = ssub.s32 64, 64
          %666 = vsyncadd %s652, %s665
          %s667 = smul.addr %s32, 64
          %s668 = scalar_lea.hbm %s7, %s667
          %s670 = sshll.u32 %s655, 4
          %s671 = int_to_ptr.vmem [resolvable:$true] %s670
          %673 = dma.vmem_to_hbm [thread:$0]  %s671, 64, %s668, %s652
        $region72: #{tpu_custom_call.1} parent=47 // pred_fallthru
          _
        // Predicated region
        $region73: #{tpu_custom_call.1} parent=47 // pred_check
          %p674 = pneg %p248
        $region74: #{tpu_custom_call.1} parent=47 // pred_check_branch
          %676 = sbr.rel (%p674) target = $region76
        $region75: #{tpu_custom_call.1} parent=47 // pred_region
          %s678 = ssub.s32 64, 64
          %679 = vsyncadd %s657, %s678
          %s680 = smul.addr %s32, 64
          %s681 = scalar_lea.hbm %s8, %s680
          %s683 = sshll.u32 %s660, 4
          %s684 = int_to_ptr.vmem [resolvable:$true] %s683
          %686 = dma.vmem_to_hbm [thread:$0]  %s684, 64, %s681, %s657
        $region76: #{tpu_custom_call.1} parent=47 // pred_fallthru
          _
      $region48: #{tpu_custom_call.1} parent=5 // pred_fallthru
        _
      %p687 = scmp.le.s32.totalorder 2, %s23
      // Predicated region
      $region77: #{tpu_custom_call.1} parent=5 // pred_check
        %p688 = pneg %p687
      $region78: #{tpu_custom_call.1} parent=5 // pred_check_branch
        %690 = sbr.rel (%p688) target = $region80
      $region79: #{tpu_custom_call.1} parent=5 // pred_region
        %s691 = ssub.s32 %s23, 2
        // Predicated region
        $region81: #{tpu_custom_call.1} parent=79 // pred_check
          %p692 = pneg %p228
        $region82: #{tpu_custom_call.1} parent=79 // pred_check_branch
          %694 = sbr.rel (%p692) target = $region84
        $region83: #{tpu_custom_call.1} parent=79 // pred_region
          %s695 = sand.u32 %s213, 1
          %s696 = scalar_lea.sflag [#allocation6], %s695
          %s697 = sand.u32 %s213, 1
          %s698 = smul.addr %s697, 4
          %s699 = scalar_lea.vmem [#allocation10], %s698
          %700 = dma.done %s696, 64
        $region84: #{tpu_custom_call.1} parent=79 // pred_fallthru
          _
        // Predicated region
        $region85: #{tpu_custom_call.1} parent=79 // pred_check
          %p701 = pneg %p254
        $region86: #{tpu_custom_call.1} parent=79 // pred_check_branch
          %703 = sbr.rel (%p701) target = $region88
        $region87: #{tpu_custom_call.1} parent=79 // pred_region
          %s704 = sand.u32 %s239, 1
          %s705 = scalar_lea.sflag [#allocation12], %s704
          %s706 = sand.u32 %s239, 1
          %s707 = smul.addr %s706, 4
          %s708 = scalar_lea.vmem [#allocation11], %s707
          %709 = dma.done %s705, 64
        $region88: #{tpu_custom_call.1} parent=79 // pred_fallthru
          _
      $region80: #{tpu_custom_call.1} parent=5 // pred_fallthru
        _
    $region6: #{tpu_custom_call.1} parent=1 // loop_footer
      %s27 = sadd.s32 1, %s23
    $region7: #{tpu_custom_call.1} parent=1 // loop_footer_branch
      %22 = sbr.rel target = $region3
    $region8: #{tpu_custom_call.1} parent=1 // loop_exit
      _
    %710 = vsyncpa [#allocation5], 1
    %s711 = scalar_lea.sflag [#allocation5], 1
    %712 = vsyncpa %s711, 1
    %713 = vsyncpa [#allocation8], 1
    %714 = vsyncpa [#allocation6], 1
    %s715 = scalar_lea.sflag [#allocation6], 1
    %716 = vsyncpa %s715, 1
    %717 = vsyncpa [#allocation12], 1
    %s718 = scalar_lea.sflag [#allocation12], 1
    %719 = vsyncpa %s718, 1

</llo_original>
